<compile_context>
chip_gen: v5e
topology: v5e:2x2
jax: 0.10.0
libtpu: 0.0.40
codegen_flags: <defaults>
</compile_context>

<pallas_src>
import math

import jax
import jax.numpy as jnp
from jax.experimental import pallas as pl
from jax.experimental.pallas import tpu as pltpu


def critic_kernel(x_ref, w1_ref, b1_ref, w2_ref, b2_ref, w3_ref, b3_ref, o_ref):
    """Fused 3-layer MLP on one feature-major batch tile.

    x_ref : (input_size, tile_b)   packed cat(s, a), transposed (batch on lanes)
    w1_ref: (hidden, input_size)   b1_ref: (hidden, 1)
    w2_ref: (hidden, hidden)       b2_ref: (hidden, 1)
    w3_ref: (hidden, 1)            b3_ref: (1, 1)
    o_ref : (1, tile_b)            lane-dense output row
    """
    # Layer 1: one K=input_size MXU matmul, N = tile_b (full column utilization).
    h1 = jnp.dot(w1_ref[...], x_ref[...], preferred_element_type=jnp.float32) + b1_ref[...]
    h1 = jnp.maximum(h1, 0.0)

    # Layer 2: hidden x hidden on the MXU, N = tile_b.
    h2 = jnp.dot(w2_ref[...], h1, preferred_element_type=jnp.float32) + b2_ref[...]
    h2 = jnp.maximum(h2, 0.0)

    # Layer 3 (output_size == 1): VPU lane-broadcast multiply + sublane reduce -> (1, tile_b).
    # Produces a lane-dense row directly (no masked 1-lane stores, no MXU tail latency).
    o_ref[...] = jnp.sum(w3_ref[...] * h2, axis=0, keepdims=True) + b3_ref[...]


def prepare_critic_params(params):
    """One-time (out of hot path) re-layout of standard params for the fused kernel.

    Input params : (w1(in,h), b1(1,h), w2(h,h), b2(1,h), w3(h,1), b3(1,1))
    Output params: (w1_t(h,in), b1_col(h,1), w2_t(h,h), b2_col(h,1), w3_col(h,1), b3(1,1))
    """
    w1, b1, w2, b2, w3, b3 = params
    assert w3.shape[1] == 1, "fused kernel is specialized for output_size == 1"
    return (w1.T, b1.reshape(-1, 1), w2.T, b2.reshape(-1, 1),
            w3.reshape(-1, 1), b3.reshape(1, 1))


def critic_forward(s, a, kernel_params, *, tile_b=None):
    """Pallas forward pass. `kernel_params` from prepare_critic_params()."""
    w1_t, b1_col, w2_t, b2_col, w3_col, b3 = kernel_params
    batch = s.shape[0]
    input_size = s.shape[1] + a.shape[1]
    hidden = w1_t.shape[0]
    out_size = w3_col.shape[1]  # == 1

    # Pack + transpose inputs into one feature-major (input_size, batch) slab (single
    # fused XLA op here; a real pipeline would store activations in this layout already).
    x_t = jnp.concatenate([s, a], axis=1).T

    # Batch tile (lane axis): full batch for small inputs; otherwise a multiple of 128
    # (the lane-tiling constraint), capped at 2048 lanes/step and sized so large batches
    # get >= 2 grid steps (v7x: lets the 2 TensorCores split the "parallel" axis).
    if tile_b is None:
        if batch < 256:
            tile_b = batch
        else:
            half = (batch + 1) // 2
            tile_b = min(2048, ((half + 127) // 128) * 128)
    tile_b = min(tile_b, batch)
    if tile_b < batch and tile_b % 128 != 0:
        raise ValueError("tile_b must be a multiple of 128 when tiling the batch axis")

    grid = (pl.cdiv(batch, tile_b),)

    def batch_block(rows):
        # Blocked on the batch (lane) axis; feature/sublane axis taken in full.
        return pl.BlockSpec((rows, tile_b), lambda i: (0, i))

    def resident(shape):
        # Same (whole-array) block every grid step -> weight stays VMEM-resident.
        return pl.BlockSpec(shape, lambda i: (0, 0))

    weight_elems = (w1_t.size + b1_col.size + w2_t.size + b2_col.size
                    + w3_col.size + b3.size)
    cost = pl.CostEstimate(
        flops=2 * batch * (input_size * hidden + hidden * hidden + hidden),
        transcendentals=0,
        bytes_accessed=4 * (batch * (input_size + out_size) + weight_elems),
    )

    out = pl.pallas_call(
        critic_kernel,
        out_shape=jax.ShapeDtypeStruct((1, batch), jnp.float32),
        grid=grid,
        in_specs=[
            batch_block(input_size),     # x_t  (input_size, tile_b)
            resident(w1_t.shape),
            resident(b1_col.shape),
            resident(w2_t.shape),
            resident(b2_col.shape),
            resident(w3_col.shape),
            resident(b3.shape),
        ],
        out_specs=batch_block(out_size),  # (1, tile_b): lane-dense output row
        compiler_params=pltpu.CompilerParams(dimension_semantics=("parallel",)),
        cost_estimate=cost,
    )(x_t, w1_t, b1_col, w2_t, b2_col, w3_col, b3)

    # (1, batch) -> (batch, 1): same row-major linear order, metadata-only reshape.
    return out.reshape(batch, out_size)


def init_linear_params(key, in_features, out_features):
    """PyTorch-style uniform(-1/sqrt(in), 1/sqrt(in)) init.

    Weight stored transposed as (in_features, out_features); bias as (1, out_features).
    """
    kw, kb = jax.random.split(key)
    bound = 1.0 / math.sqrt(in_features)
    w = jax.random.uniform(kw, (in_features, out_features), jnp.float32, -bound, bound)
    b = jax.random.uniform(kb, (1, out_features), jnp.float32, -bound, bound)
    return w, b


def reference_forward(s, a, params):
    w1, b1, w2, b2, w3, b3 = params
    x = jnp.concatenate([s, a], axis=1)
    x = jax.nn.relu(x @ w1 + b1)
    x = jax.nn.relu(x @ w2 + b2)
    return x @ w3 + b3


if __name__ == "__main__":
    # Critic shapes: state dim 24, action dim 8 -> input_size 32, hidden 32, output 1.
    state_dim, action_dim = 24, 8
    input_size = state_dim + action_dim
    hidden_size = 32
    output_size = 1

    key = jax.random.PRNGKey(0)
    k_s, k_a, k1, k2, k3 = jax.random.split(key, 5)

    w1, b1 = init_linear_params(k1, input_size, hidden_size)
    w2, b2 = init_linear_params(k2, hidden_size, hidden_size)
    w3, b3 = init_linear_params(k3, hidden_size, output_size)
    params = (w1, b1, w2, b2, w3, b3)
    kparams = prepare_critic_params(params)

    # Small case (batch=2): single grid step, blocks == full arrays.
    s = jax.random.normal(k_s, (2, state_dim), jnp.float32)
    a = jax.random.normal(k_a, (2, action_dim), jnp.float32)
    out = jax.block_until_ready(critic_forward(s, a, kparams))
    ref = reference_forward(s, a, params)
    assert out.shape == (2, output_size)
    assert jnp.allclose(out, ref, atol=1e-4, rtol=1e-4)

    # Multi-step grid with a partial last tile (batch=300, tile_b=128 -> 3 steps).
    s2 = jax.random.normal(jax.random.fold_in(k_s, 1), (300, state_dim), jnp.float32)
    a2 = jax.random.normal(jax.random.fold_in(k_a, 1), (300, action_dim), jnp.float32)
    out2 = jax.block_until_ready(critic_forward(s2, a2, kparams, tile_b=128))
    ref2 = reference_forward(s2, a2, params)
    assert out2.shape == (300, output_size)
    assert jnp.allclose(out2, ref2, atol=1e-4, rtol=1e-4)

    # Default heuristic for a larger batch: >=2 steps, 128-multiple tiles (513 -> tile 384).
    s3 = jax.random.normal(jax.random.fold_in(k_s, 2), (513, state_dim), jnp.float32)
    a3 = jax.random.normal(jax.random.fold_in(k_a, 2), (513, action_dim), jnp.float32)
    out3 = jax.block_until_ready(critic_forward(s3, a3, kparams))
    ref3 = reference_forward(s3, a3, params)
    assert out3.shape == (513, output_size)
    assert jnp.allclose(out3, ref3, atol=1e-4, rtol=1e-4)

    print("KERNEL_OK")
</pallas_src>

<mosaic_0001>
module attributes {stable_mosaic.version = 11 : i64} {
  func.func @critic_kernel(%arg0: i32, %arg1: memref<32x2xf32, #tpu.memory_space<vmem>>, %arg2: memref<32x32xf32, #tpu.memory_space<vmem>>, %arg3: memref<32x1xf32, #tpu.memory_space<vmem>>, %arg4: memref<32x32xf32, #tpu.memory_space<vmem>>, %arg5: memref<32x1xf32, #tpu.memory_space<vmem>>, %arg6: memref<32x1xf32, #tpu.memory_space<vmem>>, %arg7: memref<1x1xf32, #tpu.memory_space<vmem>>, %arg8: memref<1x2xf32, #tpu.memory_space<vmem>>) attributes {dimension_semantics = [#tpu.dimension_semantics<parallel>], iteration_bounds = array<i64: 1>, scalar_prefetch = 0 : i64, scratch_operands = 0 : i64, tpu.core_type = #tpu.core_type<tc>, window_params = [{transform_indices = @transform_0, window_bounds = array<i64: 32, 2>}, {pipeline_mode = #tpu.pipeline_mode<synchronous>, transform_indices = @transform_1, window_bounds = array<i64: 32, 32>}, {pipeline_mode = #tpu.pipeline_mode<synchronous>, transform_indices = @transform_2, window_bounds = array<i64: 32, 1>}, {pipeline_mode = #tpu.pipeline_mode<synchronous>, transform_indices = @transform_3, window_bounds = array<i64: 32, 32>}, {pipeline_mode = #tpu.pipeline_mode<synchronous>, transform_indices = @transform_4, window_bounds = array<i64: 32, 1>}, {pipeline_mode = #tpu.pipeline_mode<synchronous>, transform_indices = @transform_5, window_bounds = array<i64: 32, 1>}, {pipeline_mode = #tpu.pipeline_mode<synchronous>, transform_indices = @transform_6, window_bounds = array<i64: 1, 1>}, {transform_indices = @transform_7, window_bounds = array<i64: 1, 2>}]} {
    %c0 = arith.constant 0 : index
    %c0_0 = arith.constant 0 : index
    %0 = vector.load %arg2[%c0, %c0_0] : memref<32x32xf32, #tpu.memory_space<vmem>>, vector<32x32xf32>
    %c0_1 = arith.constant 0 : index
    %c0_2 = arith.constant 0 : index
    %1 = vector.load %arg1[%c0_1, %c0_2] : memref<32x2xf32, #tpu.memory_space<vmem>>, vector<32x2xf32>
    %cst = arith.constant dense<0.000000e+00> : vector<32x2xf32>
    %2 = tpu.matmul %0, %1, %cst {dimension_numbers = #tpu.dot_dimension_numbers<[1], [0], [0], [1], [0, 0, 1, 1], [], []>} : vector<32x32xf32>, vector<32x2xf32>, vector<32x2xf32> -> vector<32x2xf32>
    %c0_3 = arith.constant 0 : index
    %c0_4 = arith.constant 0 : index
    %3 = vector.load %arg3[%c0_3, %c0_4] : memref<32x1xf32, #tpu.memory_space<vmem>>, vector<32x1xf32>
    %4 = vector.broadcast %3 : vector<32x1xf32> to vector<32x2xf32>
    %5 = arith.addf %2, %4 : vector<32x2xf32>
    %cst_5 = arith.constant 0.000000e+00 : f32
    %6 = vector.broadcast %cst_5 : f32 to vector<32x2xf32>
    %7 = arith.maximumf %5, %6 : vector<32x2xf32>
    %c0_6 = arith.constant 0 : index
    %c0_7 = arith.constant 0 : index
    %8 = vector.load %arg4[%c0_6, %c0_7] : memref<32x32xf32, #tpu.memory_space<vmem>>, vector<32x32xf32>
    %cst_8 = arith.constant dense<0.000000e+00> : vector<32x2xf32>
    %9 = tpu.matmul %8, %7, %cst_8 {dimension_numbers = #tpu.dot_dimension_numbers<[1], [0], [0], [1], [0, 0, 1, 1], [], []>} : vector<32x32xf32>, vector<32x2xf32>, vector<32x2xf32> -> vector<32x2xf32>
    %c0_9 = arith.constant 0 : index
    %c0_10 = arith.constant 0 : index
    %10 = vector.load %arg5[%c0_9, %c0_10] : memref<32x1xf32, #tpu.memory_space<vmem>>, vector<32x1xf32>
    %11 = vector.broadcast %10 : vector<32x1xf32> to vector<32x2xf32>
    %12 = arith.addf %9, %11 : vector<32x2xf32>
    %cst_11 = arith.constant 0.000000e+00 : f32
    %13 = vector.broadcast %cst_11 : f32 to vector<32x2xf32>
    %14 = arith.maximumf %12, %13 : vector<32x2xf32>
    %c0_12 = arith.constant 0 : index
    %c0_13 = arith.constant 0 : index
    %15 = vector.load %arg6[%c0_12, %c0_13] : memref<32x1xf32, #tpu.memory_space<vmem>>, vector<32x1xf32>
    %16 = vector.broadcast %15 : vector<32x1xf32> to vector<32x2xf32>
    %17 = arith.mulf %16, %14 : vector<32x2xf32>
    %cst_14 = arith.constant dense<0.000000e+00> : vector<2xf32>
    %18 = vector.multi_reduction <add>, %17, %cst_14 [0] : vector<32x2xf32> to vector<2xf32>
    %19 = vector.shape_cast %18 : vector<2xf32> to vector<1x2xf32>
    %c0_15 = arith.constant 0 : index
    %c0_16 = arith.constant 0 : index
    %20 = vector.load %arg7[%c0_15, %c0_16] : memref<1x1xf32, #tpu.memory_space<vmem>>, vector<1x1xf32>
    %21 = vector.broadcast %20 : vector<1x1xf32> to vector<1x2xf32>
    %22 = arith.addf %19, %21 : vector<1x2xf32>
    %c0_17 = arith.constant 0 : index
    %c0_18 = arith.constant 0 : index
    %23 = vector.load %arg8[%c0_17, %c0_18] : memref<1x2xf32, #tpu.memory_space<vmem>>, vector<1x2xf32>
    tpu.vector_store %arg8[%c0_17, %c0_18], %22 {strides = array<i32>} : memref<1x2xf32, #tpu.memory_space<vmem>>, vector<1x2xf32>,
    return
  }
  func.func @transform_0(%arg0: i32) -> (i32, i32) {
    %c0_i32 = arith.constant 0 : i32
    %c0_i32_0 = arith.constant 0 : i32
    return %c0_i32, %arg0 : i32, i32
  }
  func.func @transform_1(%arg0: i32) -> (i32, i32) {
    %c0_i32 = arith.constant 0 : i32
    %c0_i32_0 = arith.constant 0 : i32
    %c0_i32_1 = arith.constant 0 : i32
    return %c0_i32, %c0_i32_0 : i32, i32
  }
  func.func @transform_2(%arg0: i32) -> (i32, i32) {
    %c0_i32 = arith.constant 0 : i32
    %c0_i32_0 = arith.constant 0 : i32
    %c0_i32_1 = arith.constant 0 : i32
    return %c0_i32, %c0_i32_0 : i32, i32
  }
  func.func @transform_3(%arg0: i32) -> (i32, i32) {
    %c0_i32 = arith.constant 0 : i32
    %c0_i32_0 = arith.constant 0 : i32
    %c0_i32_1 = arith.constant 0 : i32
    return %c0_i32, %c0_i32_0 : i32, i32
  }
  func.func @transform_4(%arg0: i32) -> (i32, i32) {
    %c0_i32 = arith.constant 0 : i32
    %c0_i32_0 = arith.constant 0 : i32
    %c0_i32_1 = arith.constant 0 : i32
    return %c0_i32, %c0_i32_0 : i32, i32
  }
  func.func @transform_5(%arg0: i32) -> (i32, i32) {
    %c0_i32 = arith.constant 0 : i32
    %c0_i32_0 = arith.constant 0 : i32
    %c0_i32_1 = arith.constant 0 : i32
    return %c0_i32, %c0_i32_0 : i32, i32
  }
  func.func @transform_6(%arg0: i32) -> (i32, i32) {
    %c0_i32 = arith.constant 0 : i32
    %c0_i32_0 = arith.constant 0 : i32
    %c0_i32_1 = arith.constant 0 : i32
    return %c0_i32, %c0_i32_0 : i32, i32
  }
  func.func @transform_7(%arg0: i32) -> (i32, i32) {
    %c0_i32 = arith.constant 0 : i32
    %c0_i32_0 = arith.constant 0 : i32
    return %c0_i32, %arg0 : i32, i32
  }
}

</mosaic_0001>

<llo_original>
// kernel: tpu_custom_call.1
$region0: #{tpu_custom_call.1}
  #allocation0 [shape = 'u32[]', space=smem, size = 0x4, offset = 0x4, fixed_abs, tag = 'smem constant byte address 0x4 - core index']
  #allocation1 [shape = 'u32[72,128]{1,0:T(1,128)}', space=vmem, size = 0x9000, scoped, tag = 'internal scratch']
  #allocation2 [shape = 'f32[1,1]{1,0:T(1,128)S(1)}', space=vmem, size = 0x200, scoped, tag = 'scoped memory for tpu_custom_call.1']
  %s0 = inlined_call_operand.vmem [shape: f32[32,2], index: 0, kind: input, shape index: {}]
  %s1 = inlined_call_operand.vmem [shape: f32[32,32], index: 1, kind: input, shape index: {}]
  %s2 = inlined_call_operand.vmem [shape: f32[32,1], index: 2, kind: input, shape index: {}]
  %s3 = inlined_call_operand.vmem [shape: f32[32,32], index: 3, kind: input, shape index: {}]
  %s4 = inlined_call_operand.vmem [shape: f32[32,1], index: 4, kind: input, shape index: {}]
  %s5 = inlined_call_operand.vmem [shape: f32[32,1], index: 5, kind: input, shape index: {}]
  %s6 = inlined_call_operand.<no memory space> [shape: f32[1,1], index: 6, kind: input, shape index: {}]
  %s7 = inlined_call_operand.hbm [shape: f32[1,2], index: 7, kind: output, shape index: {}]
  %s8 = sld [smem:[#allocation0]]
  $region38: #{tpu_custom_call.1} parent=0
    _
  %s10 = ssub.s32 1, %s8
  %s11 = scalar_select 0, %s10, %s8
  %v12 = vstv %s6
  %13 = vst [vmem:[#allocation2] sm:$0x1] %v12
  $region1: #{tpu_custom_call.1} parent=0
    #allocation3 [shape = 'u8[512]{0}', space=vmem, size = 0x400, scoped, tag = 'output window, operand 0, single buffered']
    #allocation4 [shape = 's32[1]{0}', space=sflag, size = 0x4, scoped, tag = 'scoped memory for tpu_custom_call.1']
    %14 = vsyncpa [#allocation4], 0
    // Predicated region
    $region2: #{tpu_custom_call.1} parent=1 // pred_check
      _
    $region3: #{tpu_custom_call.1} parent=1 // pred_check_branch
      %16 = sbr.rel (0) target = $region5
    $region4: #{tpu_custom_call.1} parent=1 // pred_region
      _
    $region5: #{tpu_custom_call.1} parent=1 // pred_fallthru
      _
    // Predicated region
    $region6: #{tpu_custom_call.1} parent=1 // pred_check
      _
    $region7: #{tpu_custom_call.1} parent=1 // pred_check_branch
      %18 = sbr.rel (0) target = $region9
    $region8: #{tpu_custom_call.1} parent=1 // pred_region
      _
    $region9: #{tpu_custom_call.1} parent=1 // pred_fallthru
      _
    // Predicated region
    $region10: #{tpu_custom_call.1} parent=1 // pred_check
      _
    $region11: #{tpu_custom_call.1} parent=1 // pred_check_branch
      %20 = sbr.rel (0) target = $region13
    $region12: #{tpu_custom_call.1} parent=1 // pred_region
      _
    $region13: #{tpu_custom_call.1} parent=1 // pred_fallthru
      _
    // Predicated region
    $region14: #{tpu_custom_call.1} parent=1 // pred_check
      _
    $region15: #{tpu_custom_call.1} parent=1 // pred_check_branch
      %22 = sbr.rel (0) target = $region17
    $region16: #{tpu_custom_call.1} parent=1 // pred_region
      _
    $region17: #{tpu_custom_call.1} parent=1 // pred_fallthru
      _
    // Predicated region
    $region18: #{tpu_custom_call.1} parent=1 // pred_check
      _
    $region19: #{tpu_custom_call.1} parent=1 // pred_check_branch
      %24 = sbr.rel (0) target = $region21
    $region20: #{tpu_custom_call.1} parent=1 // pred_region
      _
    $region21: #{tpu_custom_call.1} parent=1 // pred_fallthru
      _
    // Predicated region
    $region22: #{tpu_custom_call.1} parent=1 // pred_check
      _
    $region23: #{tpu_custom_call.1} parent=1 // pred_check_branch
      %26 = sbr.rel (0) target = $region25
    $region24: #{tpu_custom_call.1} parent=1 // pred_region
      _
    $region25: #{tpu_custom_call.1} parent=1 // pred_fallthru
      _
    // Predicated region
    $region26: #{tpu_custom_call.1} parent=1 // pred_check
      _
    $region27: #{tpu_custom_call.1} parent=1 // pred_check_branch
      %28 = sbr.rel (0) target = $region29
    $region28: #{tpu_custom_call.1} parent=1 // pred_region
      _
    $region29: #{tpu_custom_call.1} parent=1 // pred_fallthru
      _
    %v29 = vld [vmem:[%s1] sm:$0xff]
    %v30 = vld [vmem:[%s1 + $0x8] sm:$0xff]
    %v31 = vld [vmem:[%s1 + $0x10] sm:$0xff]
    %v32 = vld [vmem:[%s1 + $0x18] sm:$0xff]
    %v33 = vld [vmem:[%s0] sm:$0xff]
    %v34 = vld [vmem:[%s0 + $0x8] sm:$0xff]
    %v35 = vld [vmem:[%s0 + $0x10] sm:$0xff]
    %v36 = vld [vmem:[%s0 + $0x18] sm:$0xff]
    %v37 = vld [vmem:[%s2] sm:$0xff]
    %v38 = vld [vmem:[%s2 + $0x8] sm:$0xff]
    %v39 = vld [vmem:[%s2 + $0x10] sm:$0xff]
    %v40 = vld [vmem:[%s2 + $0x18] sm:$0xff]
    %42 = vset.pattern.permute.xlu0 0
    %43 = vperm.xlu0 %42, %v37
    %v44 = vpop.permute.xlu0 %43
    %47 = vset.pattern.permute.xlu0 0
    %48 = vperm.xlu0 %47, %v38
    %v49 = vpop.permute.xlu0 %48
    %52 = vset.pattern.permute.xlu0 0
    %53 = vperm.xlu0 %52, %v39
    %v54 = vpop.permute.xlu0 %53
    %57 = vset.pattern.permute.xlu0 0
    %58 = vperm.xlu0 %57, %v40
    %v59 = vpop.permute.xlu0 %58
    %vm61 = vcmask 261120
    %v63 = vsel %vm61, %v29, 0
    %v66 = vsel %vm61, %v30, 0
    %v69 = vsel %vm61, %v31, 0
    %v72 = vsel %vm61, %v32, 0
    %74 = vmatpush.msra.mxu0 0.0
    %75 = vmatpush.msra.mxu0 0.0
    %76 = vmatpush.msra.mxu0 0.0
    %77 = vmatpush.msra.mxu0 0.0
    %78 = vmatpush.msra.mxu0 0.0
    %79 = vmatpush.msra.mxu0 0.0
    %80 = vmatpush.msra.mxu0 0.0
    %81 = vmatpush.msra.mxu0 0.0
    %82 = vmatpush.msra.mxu0 0.0
    %83 = vmatpush.msra.mxu0 0.0
    %84 = vmatpush.msra.mxu0 0.0
    %85 = vmatpush.msra.mxu0 0.0
    %86 = vmatpush.msra.mxu0 %v36
    %87 = vmatpush.msra.mxu0 %v35
    %88 = vmatpush.msra.mxu0 %v34
    %89 = vmatpush.msra.mxu0 %v33
    %90 = vmatmul.f32.gmra.mxu0 %v63
    %v91 = vpop.f32.mrf.mxu0
    %v92 = vadd.f32 %v44, %v91
    %93 = vmatmul.f32.gmra.mxu0 %v66
    %v94 = vpop.f32.mrf.mxu0
    %v95 = vadd.f32 %v49, %v94
    %96 = vmatmul.f32.gmra.mxu0 %v69
    %v97 = vpop.f32.mrf.mxu0
    %v98 = vadd.f32 %v54, %v97
    %99 = vmatmul.f32.gmra.mxu0 %v72
    %v100 = vpop.f32.mrf.mxu0
    %v101 = vadd.f32 %v59, %v100
    %102 = vdwg.mxu0
    %v103 = vmax.f32 %v92, 0.0
    %v104 = vmax.f32 %v95, 0.0
    %v105 = vmax.f32 %v98, 0.0
    %v106 = vmax.f32 %v101, 0.0
    %v107 = vld [vmem:[%s3] sm:$0xff]
    %v108 = vld [vmem:[%s3 + $0x8] sm:$0xff]
    %v109 = vld [vmem:[%s3 + $0x10] sm:$0xff]
    %v110 = vld [vmem:[%s3 + $0x18] sm:$0xff]
    %v111 = vld [vmem:[%s4] sm:$0xff]
    %v112 = vld [vmem:[%s4 + $0x8] sm:$0xff]
    %v113 = vld [vmem:[%s4 + $0x10] sm:$0xff]
    %v114 = vld [vmem:[%s4 + $0x18] sm:$0xff]
    %116 = vset.pattern.permute.xlu0 0
    %117 = vperm.xlu0 %116, %v111
    %v118 = vpop.permute.xlu0 %117
    %121 = vset.pattern.permute.xlu0 0
    %122 = vperm.xlu0 %121, %v112
    %v123 = vpop.permute.xlu0 %122
    %126 = vset.pattern.permute.xlu0 0
    %127 = vperm.xlu0 %126, %v113
    %v128 = vpop.permute.xlu0 %127
    %131 = vset.pattern.permute.xlu0 0
    %132 = vperm.xlu0 %131, %v114
    %v133 = vpop.permute.xlu0 %132
    %v136 = vsel %vm61, %v107, 0
    %v139 = vsel %vm61, %v108, 0
    %v142 = vsel %vm61, %v109, 0
    %v145 = vsel %vm61, %v110, 0
    %147 = vmatpush.msra.mxu0 0.0
    %148 = vmatpush.msra.mxu0 0.0
    %149 = vmatpush.msra.mxu0 0.0
    %150 = vmatpush.msra.mxu0 0.0
    %151 = vmatpush.msra.mxu0 0.0
    %152 = vmatpush.msra.mxu0 0.0
    %153 = vmatpush.msra.mxu0 0.0
    %154 = vmatpush.msra.mxu0 0.0
    %155 = vmatpush.msra.mxu0 0.0
    %156 = vmatpush.msra.mxu0 0.0
    %157 = vmatpush.msra.mxu0 0.0
    %158 = vmatpush.msra.mxu0 0.0
    %159 = vmatpush.msra.mxu0 %v106
    %160 = vmatpush.msra.mxu0 %v105
    %161 = vmatpush.msra.mxu0 %v104
    %162 = vmatpush.msra.mxu0 %v103
    %163 = vmatmul.f32.gmra.mxu0 %v136
    %v164 = vpop.f32.mrf.mxu0
    %v165 = vadd.f32 %v118, %v164
    %166 = vmatmul.f32.gmra.mxu0 %v139
    %v167 = vpop.f32.mrf.mxu0
    %v168 = vadd.f32 %v123, %v167
    %169 = vmatmul.f32.gmra.mxu0 %v142
    %v170 = vpop.f32.mrf.mxu0
    %v171 = vadd.f32 %v128, %v170
    %172 = vmatmul.f32.gmra.mxu0 %v145
    %v173 = vpop.f32.mrf.mxu0
    %v174 = vadd.f32 %v133, %v173
    %175 = vdwg.mxu0
    %v176 = vmax.f32 %v165, 0.0
    %v177 = vmax.f32 %v168, 0.0
    %v178 = vmax.f32 %v171, 0.0
    %v179 = vmax.f32 %v174, 0.0
    %v180 = vld [vmem:[%s5] sm:$0xff]
    %v181 = vld [vmem:[%s5 + $0x8] sm:$0xff]
    %v182 = vld [vmem:[%s5 + $0x10] sm:$0xff]
    %v183 = vld [vmem:[%s5 + $0x18] sm:$0xff]
    %185 = vset.pattern.permute.xlu0 0
    %186 = vperm.xlu0 %185, %v180
    %v187 = vpop.permute.xlu0 %186
    %190 = vset.pattern.permute.xlu0 0
    %191 = vperm.xlu0 %190, %v181
    %v192 = vpop.permute.xlu0 %191
    %195 = vset.pattern.permute.xlu0 0
    %196 = vperm.xlu0 %195, %v182
    %v197 = vpop.permute.xlu0 %196
    %200 = vset.pattern.permute.xlu0 0
    %201 = vperm.xlu0 %200, %v183
    %v202 = vpop.permute.xlu0 %201
    %v204 = vmul.f32 %v187, %v176
    %v205 = vmul.f32 %v192, %v177
    %v206 = vmul.f32 %v197, %v178
    %v207 = vmul.f32 %v202, %v179
    %vm208 = vcmask 15360
    %v209 = vsel %vm208, %v204, 0.0
    %v210 = vsel %vm208, %v205, 0.0
    %v211 = vadd.f32 %v209, %v210
    %v212 = vsel %vm208, %v206, 0.0
    %v213 = vadd.f32 %v211, %v212
    %v214 = vsel %vm208, %v207, 0.0
    %v215 = vadd.f32 %v213, %v214
    %v216 = vrot.slane %v215, 4
    %v217 = vadd.f32 %v215, %v216
    %v218 = vrot.slane %v217, 2
    %v219 = vadd.f32 %v217, %v218
    %v220 = vrot.slane %v219, 1
    %v221 = vadd.f32 %v219, %v220
    %v222 = vld [vmem:[#allocation2] sm:$0x1]
    %224 = vset.pattern.permute.xlu0 0
    %225 = vperm.xlu0 %224, %v222
    %v226 = vpop.permute.xlu0 %225
    %v228 = vperm.slane %v226, 0
    %v229 = vadd.f32 %v221, %v228
    %vm230 = vcmask 8192
    %231 = vst.msk [vmem:[#allocation3] sm:$0x1] %vm230, %v229
    // Predicated region
    $region30: #{tpu_custom_call.1} parent=1 // pred_check
      _
    $region31: #{tpu_custom_call.1} parent=1 // pred_check_branch
      %233 = sbr.rel (0) target = $region33
    $region32: #{tpu_custom_call.1} parent=1 // pred_region
      %235 = vsyncadd [#allocation4], 0
      %s237 = sshll.u32 [#allocation3], 4
      %s238 = int_to_ptr.vmem [resolvable:$true] %s237
      %s239 = sshll.u32 %s7, 4
      %s240 = int_to_ptr.hbm [resolvable:$true] %s239
      %242 = dma.vmem_to_hbm [thread:$0]  %s238, 16, %s240, [#allocation4]
    $region33: #{tpu_custom_call.1} parent=1 // pred_fallthru
      _
    // Predicated region
    $region34: #{tpu_custom_call.1} parent=1 // pred_check
      _
    $region35: #{tpu_custom_call.1} parent=1 // pred_check_branch
      %244 = sbr.rel (0) target = $region37
    $region36: #{tpu_custom_call.1} parent=1 // pred_region
      %246 = dma.done [#allocation4], 16
    $region37: #{tpu_custom_call.1} parent=1 // pred_fallthru
      _
    %247 = vsyncpa [#allocation4], 1

</llo_original>
